<compile_context>
chip_gen: v7x
topology: tpu7x:2x2x1
jax: 0.10.0
libtpu: 0.0.40
codegen_flags: <defaults>
</compile_context>

<pallas_src>
import functools
import math

import jax
import jax.numpy as jnp
from jax.experimental import pallas as pl
from jax.experimental.pallas import tpu as pltpu


def _cdiv(a, b):
    return -(-a // b)


def _round_down(x, m):
    return max(m, (int(x) // m) * m)


def _compiler_params():
    params = dict(dimension_semantics=("parallel", "arbitrary"))
    # Generation-aware scoped-VMEM limit (leave ample headroom on every chip:
    # 48 MiB on 128 MiB-VMEM v5e/v6e, 32 MiB on 64 MiB-VMEM v7x).  The explicit
    # working set is <= ~8.5 MiB either way, so the fallback (no limit set,
    # default scoped budget) also compiles on all generations.
    try:
        cap = int(pltpu.get_tpu_info().vmem_capacity_bytes)
        params["vmem_limit_bytes"] = min(cap // 2, 48 * 1024 * 1024)
    except Exception:
        pass
    return pltpu.CompilerParams(**params)


def _soft_dice_kernel(p_ref, g_ref, dice_ref, tp_acc, pg_acc, *,
                      eps, tile_len, valid_extent, mask_axis):
    """Grid = (N, n_tiles); row i accumulates sum(g*p) and sum(p+g) over its
    reduction tiles into lane-dense VMEM accumulators (pure VALU adds in
    steady state) and emits its dice ratio in the last-tile epilogue."""
    j = pl.program_id(1)                     # reduction-tile index (inner axis)

    @pl.when(j == 0)
    def _init():
        tp_acc[...] = jnp.zeros_like(tp_acc)
        pg_acc[...] = jnp.zeros_like(pg_acc)

    p = p_ref[...].astype(jnp.float32)       # in-kernel upcast; HBM stays native dtype
    g = g_ref[...].astype(jnp.float32)

    if valid_extent is not None:
        # Ragged tail handled in-kernel: zero out-of-range positions of the
        # (possibly partial) boundary block.  No wrapper-side padding pass.
        idx = jax.lax.broadcasted_iota(jnp.int32, p.shape, mask_axis)
        valid = (j * tile_len + idx) < valid_extent
        p = jnp.where(valid, p, 0.0)
        g = jnp.where(valid, g, 0.0)

    # Lane-dense accumulation: no per-step cross-lane reduce, no narrow stores.
    tp_acc[...] += g * p
    pg_acc[...] += p + g

    @pl.when(j == pl.num_programs(1) - 1)
    def _epilogue():
        tp = jnp.sum(tp_acc[...])
        denom = jnp.sum(pg_acc[...])         # sum(pred) + sum(gt) == 2*tp + fp + fn
        dice = (2.0 * tp + eps) / (denom + eps)
        dice_ref[...] = jnp.full(dice_ref.shape, dice, jnp.float32)


def soft_dice_loss(y_pr, y_gt, eps=1e-5, *,
                   vmem_budget_bytes=8 * 1024 * 1024,
                   max_block_rows=None, max_block_cols=None):
    """JAX/Pallas equivalent of SoftDiceLoss.forward (module has no params)."""
    n = y_gt.shape[0]
    d = math.prod(y_pr.shape[1:])
    assert y_pr.shape[0] == n, "pred/gt batch sizes must match"
    assert math.prod(y_gt.shape[1:]) == d, "pred/gt per-sample sizes must match"

    in_item = max(jnp.dtype(y_pr.dtype).itemsize, jnp.dtype(y_gt.dtype).itemsize)

    if d % 128 == 0:
        # ---- Path A: sublane-packed (N, D/128, 128) view (free reshape) ----
        dr = d // 128
        p_in = y_pr.reshape(n, dr, 128)
        g_in = y_gt.reshape(n, dr, 128)
        # bytes per tile-row: 2 streams x 2 pipeline buffers (native dtype)
        # + 2 f32 accumulators; sublanes are fully packed in this layout.
        per_row = 2 * 2 * 128 * in_item + 2 * 128 * 4
        tr = _round_down(vmem_budget_bytes // per_row, 8)
        if max_block_rows is not None:
            tr = _round_down(min(tr, max_block_rows), 8)
        if dr <= tr:
            tr, n_tiles, valid_extent = dr, 1, None      # single tile, no mask
        else:
            n_tiles = _cdiv(dr, tr)
            valid_extent = dr if dr % tr else None
        block = (None, tr, 128)
        in_map = lambda i, j: (i, j, 0)
        blk_r, blk_c = tr, 128
        mask_axis, tile_len = 0, tr
    else:
        # ---- Path B: ragged D stays on the lane axis, in-kernel tail mask ----
        p_in = y_pr.reshape(n, 1, d)
        g_in = y_gt.reshape(n, 1, d)
        # padded bytes per lane column: each single-row input buffer pads to a
        # full sublane group (32 B/lane regardless of dtype) x 4 buffers,
        # plus 2 f32 accumulators (8 sublanes x 4 B = 32 B/lane each).
        per_col = 2 * 2 * 32 + 2 * 32
        tc = _round_down(vmem_budget_bytes // per_col, 128)
        if max_block_cols is not None:
            tc = _round_down(min(tc, max_block_cols), 128)
        if d <= tc:
            tc, n_tiles, valid_extent = d, 1, None       # single tile, no mask
        else:
            n_tiles = _cdiv(d, tc)
            valid_extent = d if d % tc else None
        block = (None, 1, tc)
        in_map = lambda i, j: (i, 0, j)
        blk_r, blk_c = 1, tc
        mask_axis, tile_len = 1, tc

    in_spec = pl.BlockSpec(block, in_map)
    out_spec = pl.BlockSpec((None, 1, 128), lambda i, j: (i, 0, 0))

    kernel = functools.partial(
        _soft_dice_kernel, eps=float(eps), tile_len=tile_len,
        valid_extent=valid_extent, mask_axis=mask_axis)

    dice = pl.pallas_call(
        kernel,
        out_shape=jax.ShapeDtypeStruct((n, 1, 128), jnp.float32),
        grid_spec=pltpu.PrefetchScalarGridSpec(
            num_scalar_prefetch=0,
            grid=(n, n_tiles),                           # (parallel rows, reduction tiles)
            in_specs=[in_spec, in_spec],
            out_specs=out_spec,
            scratch_shapes=[pltpu.VMEM((blk_r, blk_c), jnp.float32),
                            pltpu.VMEM((blk_r, blk_c), jnp.float32)],
        ),
        compiler_params=_compiler_params(),
    )(p_in, g_in)

    # Tiny epilogue over N values in plain XLA (keeps the kernel epilogue per
    # row so the N axis stays a clean "parallel" axis for v7x megacore).
    dice_per_sample = dice[:, 0, 0]
    return 1.0 - jnp.sum(dice_per_sample) / n


# ----------------------------- pure-JAX reference ----------------------------
def _ref_soft_dice(y_pr, y_gt, eps=1e-5):
    n = y_gt.shape[0]
    p = y_pr.reshape(n, -1).astype(jnp.float32)
    g = y_gt.reshape(n, -1).astype(jnp.float32)
    tp = jnp.sum(g * p, axis=1)
    fp = jnp.sum(p, axis=1) - tp
    fn = jnp.sum(g, axis=1) - tp
    dice = (2.0 * tp + eps) / (2.0 * tp + fp + fn + eps)
    return 1.0 - dice.sum() / n


if __name__ == "__main__":
    key = jax.random.PRNGKey(0)
    k1, k2, k3, k4, k5, k6 = jax.random.split(key, 6)

    # 1) D multiple of 128 (sublane-packed path), single reduction tile
    B, C, H, W = 2, 4, 16, 16
    y_pr = jax.nn.sigmoid(jax.random.normal(k1, (B, C, H, W), dtype=jnp.float32))
    y_gt = (jax.random.uniform(k2, (B, C, H, W)) > 0.5).astype(jnp.float32)
    loss = soft_dice_loss(y_pr, y_gt)
    jax.block_until_ready(loss)
    ref = _ref_soft_dice(y_pr, y_gt)
    assert jnp.allclose(loss, ref, rtol=1e-5, atol=1e-5), (loss, ref)

    # 2) packed path, forced multi-tile with a ragged (masked) boundary tile
    y_pr3 = jax.nn.sigmoid(jax.random.normal(k3, (2, 4, 32, 48), dtype=jnp.float32))
    y_gt3 = (jax.random.uniform(k4, (2, 4, 32, 48)) > 0.5).astype(jnp.float32)
    loss3 = soft_dice_loss(y_pr3, y_gt3, max_block_rows=40)   # 48 rows -> tiles of 40 + 8
    jax.block_until_ready(loss3)
    ref3 = _ref_soft_dice(y_pr3, y_gt3)
    assert jnp.allclose(loss3, ref3, rtol=1e-5, atol=1e-5), (loss3, ref3)

    # 3) D NOT a multiple of 128 (ragged path, no wrapper pad), single tile
    y_pr2 = jax.nn.sigmoid(jax.random.normal(k5, (3, 3, 10, 10), dtype=jnp.float32))
    y_gt2 = (jax.random.uniform(k6, (3, 3, 10, 10)) > 0.5).astype(jnp.float32)
    loss2 = soft_dice_loss(y_pr2, y_gt2)
    jax.block_until_ready(loss2)
    ref2 = _ref_soft_dice(y_pr2, y_gt2)
    assert jnp.allclose(loss2, ref2, rtol=1e-5, atol=1e-5), (loss2, ref2)

    # 4) ragged path, forced multi-tile + in-kernel tail masking (300 = 2*128 + 44)
    loss2t = soft_dice_loss(y_pr2, y_gt2, max_block_cols=128)
    jax.block_until_ready(loss2t)
    assert jnp.allclose(loss2t, ref2, rtol=1e-5, atol=1e-5), (loss2t, ref2)

    print("KERNEL_OK")
</pallas_src>

<mosaic_0001>
module attributes {stable_mosaic.version = 11 : i64} {
  func.func @_soft_dice_kernel(%arg0: i32, %arg1: i32, %arg2: memref<1x8x128xf32, #tpu.memory_space<vmem>>, %arg3: memref<1x8x128xf32, #tpu.memory_space<vmem>>, %arg4: memref<1x1x128xf32, #tpu.memory_space<vmem>>, %arg5: memref<8x128xf32, #tpu.memory_space<vmem>>, %arg6: memref<8x128xf32, #tpu.memory_space<vmem>>) attributes {dimension_semantics = [#tpu.dimension_semantics<parallel>, #tpu.dimension_semantics<arbitrary>], iteration_bounds = array<i64: 2, 1>, scalar_prefetch = 0 : i64, scratch_operands = 2 : i64, tpu.core_type = #tpu.core_type<tc>, window_params = [{transform_indices = @transform_0, window_bounds = array<i64: 1, 8, 128>}, {transform_indices = @transform_1, window_bounds = array<i64: 1, 8, 128>}, {transform_indices = @transform_2, window_bounds = array<i64: 1, 1, 128>}]} {
    %c0_i32 = arith.constant 0 : i32
    %0 = arith.cmpi eq, %arg1, %c0_i32 : i32
    %1 = arith.extui %0 : i1 to i32
    %c0_i32_0 = arith.constant 0 : i32
    %2 = arith.cmpi ne, %1, %c0_i32_0 : i32
    scf.if %2 {
      %cst = arith.constant 0.000000e+00 : f32
      %18 = vector.broadcast %cst : f32 to vector<8x128xf32>
      %c0_16 = arith.constant 0 : index
      %c0_17 = arith.constant 0 : index
      %19 = vector.load %arg5[%c0_16, %c0_17] : memref<8x128xf32, #tpu.memory_space<vmem>>, vector<8x128xf32>
      tpu.vector_store %arg5[%c0_16, %c0_17], %18 {strides = array<i32>} : memref<8x128xf32, #tpu.memory_space<vmem>>, vector<8x128xf32>,
      %cst_18 = arith.constant 0.000000e+00 : f32
      %20 = vector.broadcast %cst_18 : f32 to vector<8x128xf32>
      %c0_19 = arith.constant 0 : index
      %c0_20 = arith.constant 0 : index
      %21 = vector.load %arg6[%c0_19, %c0_20] : memref<8x128xf32, #tpu.memory_space<vmem>>, vector<8x128xf32>
      tpu.vector_store %arg6[%c0_19, %c0_20], %20 {strides = array<i32>} : memref<8x128xf32, #tpu.memory_space<vmem>>, vector<8x128xf32>,
    } else {
    }
    %c0 = arith.constant 0 : index
    %c0_1 = arith.constant 0 : index
    %c0_2 = arith.constant 0 : index
    %3 = vector.load %arg2[%c0, %c0_1, %c0_2] : memref<1x8x128xf32, #tpu.memory_space<vmem>>, vector<1x8x128xf32>
    %4 = vector.shape_cast %3 : vector<1x8x128xf32> to vector<8x128xf32>
    %c0_3 = arith.constant 0 : index
    %c0_4 = arith.constant 0 : index
    %c0_5 = arith.constant 0 : index
    %5 = vector.load %arg3[%c0_3, %c0_4, %c0_5] : memref<1x8x128xf32, #tpu.memory_space<vmem>>, vector<1x8x128xf32>
    %6 = vector.shape_cast %5 : vector<1x8x128xf32> to vector<8x128xf32>
    %c0_6 = arith.constant 0 : index
    %c0_7 = arith.constant 0 : index
    %7 = vector.load %arg5[%c0_6, %c0_7] : memref<8x128xf32, #tpu.memory_space<vmem>>, vector<8x128xf32>
    %8 = arith.mulf %6, %4 : vector<8x128xf32>
    %9 = arith.addf %7, %8 : vector<8x128xf32>
    %c0_8 = arith.constant 0 : index
    %c0_9 = arith.constant 0 : index
    %10 = vector.load %arg5[%c0_8, %c0_9] : memref<8x128xf32, #tpu.memory_space<vmem>>, vector<8x128xf32>
    tpu.vector_store %arg5[%c0_8, %c0_9], %9 {strides = array<i32>} : memref<8x128xf32, #tpu.memory_space<vmem>>, vector<8x128xf32>,
    %c0_10 = arith.constant 0 : index
    %c0_11 = arith.constant 0 : index
    %11 = vector.load %arg6[%c0_10, %c0_11] : memref<8x128xf32, #tpu.memory_space<vmem>>, vector<8x128xf32>
    %12 = arith.addf %4, %6 : vector<8x128xf32>
    %13 = arith.addf %11, %12 : vector<8x128xf32>
    %c0_12 = arith.constant 0 : index
    %c0_13 = arith.constant 0 : index
    %14 = vector.load %arg6[%c0_12, %c0_13] : memref<8x128xf32, #tpu.memory_space<vmem>>, vector<8x128xf32>
    tpu.vector_store %arg6[%c0_12, %c0_13], %13 {strides = array<i32>} : memref<8x128xf32, #tpu.memory_space<vmem>>, vector<8x128xf32>,
    %c0_i32_14 = arith.constant 0 : i32
    %15 = arith.cmpi eq, %arg1, %c0_i32_14 : i32
    %16 = arith.extui %15 : i1 to i32
    %c0_i32_15 = arith.constant 0 : i32
    %17 = arith.cmpi ne, %16, %c0_i32_15 : i32
    scf.if %17 {
      %c0_16 = arith.constant 0 : index
      %c0_17 = arith.constant 0 : index
      %18 = vector.load %arg5[%c0_16, %c0_17] : memref<8x128xf32, #tpu.memory_space<vmem>>, vector<8x128xf32>
      %19 = vector.shape_cast %18 : vector<8x128xf32> to vector<1x8x128xf32>
      %cst = arith.constant dense<0.000000e+00> : vector<1xf32>
      %20 = vector.multi_reduction <add>, %19, %cst [1, 2] : vector<1x8x128xf32> to vector<1xf32>
      %21 = vector.shape_cast %20 : vector<1xf32> to vector<1x1x1xf32>
      %22 = vector.extract %21[0, 0, 0] : f32 from vector<1x1x1xf32>
      %c0_18 = arith.constant 0 : index
      %c0_19 = arith.constant 0 : index
      %23 = vector.load %arg6[%c0_18, %c0_19] : memref<8x128xf32, #tpu.memory_space<vmem>>, vector<8x128xf32>
      %24 = vector.shape_cast %23 : vector<8x128xf32> to vector<1x8x128xf32>
      %cst_20 = arith.constant dense<0.000000e+00> : vector<1xf32>
      %25 = vector.multi_reduction <add>, %24, %cst_20 [1, 2] : vector<1x8x128xf32> to vector<1xf32>
      %26 = vector.shape_cast %25 : vector<1xf32> to vector<1x1x1xf32>
      %27 = vector.extract %26[0, 0, 0] : f32 from vector<1x1x1xf32>
      %cst_21 = arith.constant 2.000000e+00 : f32
      %28 = arith.mulf %cst_21, %22 : f32
      %cst_22 = arith.constant 9.99999974E-6 : f32
      %29 = arith.addf %28, %cst_22 : f32
      %cst_23 = arith.constant 9.99999974E-6 : f32
      %30 = arith.addf %27, %cst_23 : f32
      %31 = arith.divf %29, %30 : f32
      %32 = vector.broadcast %31 : f32 to vector<1x128xf32>
      %c0_24 = arith.constant 0 : index
      %c0_25 = arith.constant 0 : index
      %c0_26 = arith.constant 0 : index
      %33 = vector.load %arg4[%c0_24, %c0_25, %c0_26] : memref<1x1x128xf32, #tpu.memory_space<vmem>>, vector<1x1x128xf32>
      %34 = vector.shape_cast %33 : vector<1x1x128xf32> to vector<1x128xf32>
      %35 = vector.shape_cast %32 : vector<1x128xf32> to vector<1x1x128xf32>
      tpu.vector_store %arg4[%c0_24, %c0_25, %c0_26], %35 {strides = array<i32>} : memref<1x1x128xf32, #tpu.memory_space<vmem>>, vector<1x1x128xf32>,
    } else {
    }
    return
  }
  func.func @transform_0(%arg0: i32, %arg1: i32) -> (i32, i32, i32) {
    %c0_i32 = arith.constant 0 : i32
    %c0_i32_0 = arith.constant 0 : i32
    return %arg0, %arg1, %c0_i32 : i32, i32, i32
  }
  func.func @transform_1(%arg0: i32, %arg1: i32) -> (i32, i32, i32) {
    %c0_i32 = arith.constant 0 : i32
    %c0_i32_0 = arith.constant 0 : i32
    return %arg0, %arg1, %c0_i32 : i32, i32, i32
  }
  func.func @transform_2(%arg0: i32, %arg1: i32) -> (i32, i32, i32) {
    %c0_i32 = arith.constant 0 : i32
    %c0_i32_0 = arith.constant 0 : i32
    %c0_i32_1 = arith.constant 0 : i32
    return %arg0, %c0_i32, %c0_i32_0 : i32, i32, i32
  }
}

</mosaic_0001>

<llo_original>
// kernel: tpu_custom_call.1
$region0: #{tpu_custom_call.1}
  #allocation0 [shape = 'u32[]', space=smem, size = 0x4, offset = 0x4, fixed_abs, tag = 'smem constant byte address 0x4 - core index']
  #allocation1 [shape = 'u32[144,128]{1,0:T(1,128)}', space=vmem, size = 0x12000, scoped, tag = 'internal scratch']
  #allocation2 [shape = 'f32[8,128]{1,0:T(8,128)}', space=vmem, size = 0x1000, scoped, tag = 'scratch operand']
  #allocation3 [shape = 'f32[8,128]{1,0:T(8,128)}', space=vmem, size = 0x1000, scoped, tag = 'scratch operand']
  %s0 = inlined_call_operand.hbm [shape: f32[2,8,128], index: 0, kind: input, shape index: {}]
  %s1 = inlined_call_operand.hbm [shape: f32[2,8,128], index: 1, kind: input, shape index: {}]
  %s2 = inlined_call_operand.hbm [shape: f32[2,1,128], index: 2, kind: output, shape index: {}]
  %s3 = sld [smem:[#allocation0]]
  $region57: #{tpu_custom_call.1} parent=0
    _
  %s5 = ssub.s32 1, %s3
  %s6 = scalar_select 0, %s5, %s3
  $region1: #{tpu_custom_call.1} parent=0
    #allocation4 [shape = 'u8[8192]{0}', space=vmem, size = 0x2000, scoped, tag = 'input window, operand 0']
    #allocation5 [shape = 's32[2]{0}', space=sflag, size = 0x8, scoped, tag = 'scoped memory for tpu_custom_call.1']
    #allocation6 [shape = 's32[2]{0}', space=sflag, size = 0x8, scoped, tag = 'scoped memory for tpu_custom_call.1']
    #allocation7 [shape = 'u8[8192]{0}', space=vmem, size = 0x2000, scoped, tag = 'input window, operand 1']
    #allocation8 [shape = 's32[2]{0}', space=sflag, size = 0x8, scoped, tag = 'scoped memory for tpu_custom_call.1']
    #allocation9 [shape = 'u8[1024]{0}', space=vmem, size = 0x400, scoped, tag = 'output window, operand 0']
    %7 = vsyncpa [#allocation5], 0
    %s8 = scalar_lea.sflag [#allocation5], 1
    %9 = vsyncpa %s8, 0
    %10 = vsyncpa [#allocation8], 0
    %s11 = scalar_lea.sflag [#allocation8], 1
    %12 = vsyncpa %s11, 0
    %13 = vsyncpa [#allocation6], 0
    %s14 = scalar_lea.sflag [#allocation6], 1
    %15 = vsyncpa %s14, 0
    loop: start=0, step=1, limit=4
    $region2: #{tpu_custom_call.1} parent=1 // loop_pre_header
      _
    $region3: #{tpu_custom_call.1} parent=1 // loop_header
      %s17 = sphi 0, %s21
      %p18 = scmp.ge.s32.totalorder %s17, 4
      %s24 = sphi 0, %s36
      %s25 = sphi 0, %s32
      %s26 = sphi 0, %s24
      %s27 = sphi 0, %s25
      %s28 = sphi 0, %s26
      %s29 = sphi 0, %s27
      %s41 = sphi 0, %s43
      %s44 = sphi 0, %s41
      %s45 = sphi 0, %s44
      %s61 = sphi 0, %s45
      %s69 = sphi 0, %s71
      %s72 = sphi 0, %s69
      %s73 = sphi 0, %s72
      %s89 = sphi 0, %s73
      %s95 = sphi 0, %s97
      %s98 = sphi 0, %s95
      %s99 = sphi 0, %s98
      %s115 = sphi 0, %s99
    $region4: #{tpu_custom_call.1} parent=1 // loop_header_branch
      %20 = sbr.rel (%p18) target = $region8
    $region5: #{tpu_custom_call.1} parent=1 // loop_body
      %s22 = ssub.s32 %s17, 1
      %s23 = ssub.s32 %s17, 2
      %s30 = sadd.s32 1, %s25
      %p31 = scmp.ge.s32.totalorder %s30, 1
      %s32 = scalar_select %p31, 0, %s30
      %s33 = sadd.s32 1, %s24
      %s34 = scalar_select %p31, %s33, %s24
      %p35 = scmp.ge.s32.totalorder %s34, 2
      %s36 = scalar_select %p35, 0, %s34
      %s37 = ssub.s32 %s24, %s36
      %s38 = ssub.s32 %s25, %s32
      %s39 = sor.u32 %s37, %s38
      %p40 = scmp.eq.s32.totalorder %s39, 0
      %s42 = sadd.s32 %s41, 1
      %s43 = scalar_select %p40, %s41, %s42
      %p46 = pneg %p40
      %p47 = scmp.eq.s32.totalorder %s17, 1
      %p48 = por %p46, %p47
      %p49 = scmp.ne.s32.totalorder %s41, %s44
      %p50 = scmp.eq.s32.totalorder %s17, 0
      %p51 = por %p49, %p50
      %p52 = scmp.ne.s32.totalorder %s41, %s44
      %p53 = scmp.eq.s32.totalorder %s22, 1
      %p54 = por %p52, %p53
      %p55 = scmp.ne.s32.totalorder %s44, %s45
      %p56 = scmp.eq.s32.totalorder %s22, 0
      %p57 = por %p55, %p56
      %p58 = scmp.ne.s32.totalorder %s44, %s45
      %p59 = scmp.eq.s32.totalorder %s23, 1
      %p60 = por %p58, %p59
      %p62 = scmp.ne.s32.totalorder %s45, %s61
      %p63 = scmp.eq.s32.totalorder %s23, 0
      %p64 = por %p62, %p63
      %s65 = ssub.s32 %s24, %s36
      %s66 = ssub.s32 %s25, %s32
      %s67 = sor.u32 %s65, %s66
      %p68 = scmp.eq.s32.totalorder %s67, 0
      %s70 = sadd.s32 %s69, 1
      %s71 = scalar_select %p68, %s69, %s70
      %p74 = pneg %p68
      %p75 = scmp.eq.s32.totalorder %s17, 1
      %p76 = por %p74, %p75
      %p77 = scmp.ne.s32.totalorder %s69, %s72
      %p78 = scmp.eq.s32.totalorder %s17, 0
      %p79 = por %p77, %p78
      %p80 = scmp.ne.s32.totalorder %s69, %s72
      %p81 = scmp.eq.s32.totalorder %s22, 1
      %p82 = por %p80, %p81
      %p83 = scmp.ne.s32.totalorder %s72, %s73
      %p84 = scmp.eq.s32.totalorder %s22, 0
      %p85 = por %p83, %p84
      %p86 = scmp.ne.s32.totalorder %s72, %s73
      %p87 = scmp.eq.s32.totalorder %s23, 1
      %p88 = por %p86, %p87
      %p90 = scmp.ne.s32.totalorder %s73, %s89
      %p91 = scmp.eq.s32.totalorder %s23, 0
      %p92 = por %p90, %p91
      %s93 = ssub.s32 %s24, %s36
      %p94 = scmp.eq.s32.totalorder %s93, 0
      %s96 = sadd.s32 %s95, 1
      %s97 = scalar_select %p94, %s95, %s96
      %p100 = pneg %p94
      %p101 = scmp.eq.s32.totalorder %s17, 1
      %p102 = por %p100, %p101
      %p103 = scmp.ne.s32.totalorder %s95, %s98
      %p104 = scmp.eq.s32.totalorder %s17, 0
      %p105 = por %p103, %p104
      %p106 = scmp.ne.s32.totalorder %s95, %s98
      %p107 = scmp.eq.s32.totalorder %s22, 1
      %p108 = por %p106, %p107
      %p109 = scmp.ne.s32.totalorder %s98, %s99
      %p110 = scmp.eq.s32.totalorder %s22, 0
      %p111 = por %p109, %p110
      %p112 = scmp.ne.s32.totalorder %s98, %s99
      %p113 = scmp.eq.s32.totalorder %s23, 1
      %p114 = por %p112, %p113
      %p116 = scmp.ne.s32.totalorder %s99, %s115
      %p117 = scmp.eq.s32.totalorder %s23, 0
      %p118 = por %p116, %p117
      %p119 = scmp.le.s32.totalorder 1, %s17
      %p120 = scmp.lt.s32.totalorder %s17, 3
      %p121 = pnand %p119, %p120
      %p122 = pneg %p121
      // Predicated region
      $region9: #{tpu_custom_call.1} parent=5 // pred_check
        _
      $region10: #{tpu_custom_call.1} parent=5 // pred_check_branch
        %124 = sbr.rel (%p121) target = $region12
      $region11: #{tpu_custom_call.1} parent=5 // pred_region
        %s125 = ssub.s32 %s17, 1
      $region12: #{tpu_custom_call.1} parent=5 // pred_fallthru
        _
      %p126 = scmp.lt.s32.totalorder %s17, 2
      // Predicated region
      $region13: #{tpu_custom_call.1} parent=5 // pred_check
        %p127 = pneg %p126
      $region14: #{tpu_custom_call.1} parent=5 // pred_check_branch
        %129 = sbr.rel (%p127) target = $region16
      $region15: #{tpu_custom_call.1} parent=5 // pred_region
        // Predicated region
        $region17: #{tpu_custom_call.1} parent=15 // pred_check
          %p130 = pneg %p51
        $region18: #{tpu_custom_call.1} parent=15 // pred_check_branch
          %132 = sbr.rel (%p130) target = $region20
        $region19: #{tpu_custom_call.1} parent=15 // pred_region
          %s133 = sand.u32 %s41, 1
          %s134 = scalar_lea.sflag [#allocation5], %s133
          %s135 = sand.u32 %s41, 1
          %s136 = smul.addr %s135, 8
          %s137 = scalar_lea.vmem [#allocation4], %s136
          %s139 = ssub.s32 128, 128
          %140 = vsyncadd %s134, %s139
          %s141 = sadd.s32 %s25, %s24
          %s142 = smul.addr %s141, 128
          %s143 = scalar_lea.hbm %s0, %s142
          %s145 = sshll.u32 %s137, 4
          %s146 = int_to_ptr.vmem [resolvable:$true] %s145
          %148 = dma.hbm_to_vmem [thread:$0]  %s143, 128, %s146, %s134
        $region20: #{tpu_custom_call.1} parent=15 // pred_fallthru
          _
        // Predicated region
        $region21: #{tpu_custom_call.1} parent=15 // pred_check
          %p149 = pneg %p79
        $region22: #{tpu_custom_call.1} parent=15 // pred_check_branch
          %151 = sbr.rel (%p149) target = $region24
        $region23: #{tpu_custom_call.1} parent=15 // pred_region
          %s152 = sand.u32 %s69, 1
          %s153 = scalar_lea.sflag [#allocation8], %s152
          %s154 = sand.u32 %s69, 1
          %s155 = smul.addr %s154, 8
          %s156 = scalar_lea.vmem [#allocation7], %s155
          %s158 = ssub.s32 128, 128
          %159 = vsyncadd %s153, %s158
          %s160 = sadd.s32 %s25, %s24
          %s161 = smul.addr %s160, 128
          %s162 = scalar_lea.hbm %s1, %s161
          %s164 = sshll.u32 %s156, 4
          %s165 = int_to_ptr.vmem [resolvable:$true] %s164
          %167 = dma.hbm_to_vmem [thread:$0]  %s162, 128, %s165, %s153
        $region24: #{tpu_custom_call.1} parent=15 // pred_fallthru
          _
      $region16: #{tpu_custom_call.1} parent=5 // pred_fallthru
        _
      %p168 = scmp.le.s32.totalorder 1, %s17
      %p169 = scmp.lt.s32.totalorder %s17, 3
      %p170 = pnand %p168, %p169
      %p171 = pneg %p170
      // Predicated region
      $region25: #{tpu_custom_call.1} parent=5 // pred_check
        _
      $region26: #{tpu_custom_call.1} parent=5 // pred_check_branch
        %173 = sbr.rel (%p170) target = $region28
      $region27: #{tpu_custom_call.1} parent=5 // pred_region
        %s174 = ssub.s32 %s17, 1
        %s175 = sand.u32 %s44, 1
        %s176 = scalar_lea.sflag [#allocation5], %s175
        %s177 = sand.u32 %s44, 1
        %s178 = smul.addr %s177, 8
        %s179 = scalar_lea.vmem [#allocation4], %s178
        // Predicated region
        $region29: #{tpu_custom_call.1} parent=27 // pred_check
          %p180 = pneg %p57
        $region30: #{tpu_custom_call.1} parent=27 // pred_check_branch
          %182 = sbr.rel (%p180) target = $region32
        $region31: #{tpu_custom_call.1} parent=27 // pred_region
          %183 = dma.done %s176, 128
        $region32: #{tpu_custom_call.1} parent=27 // pred_fallthru
          _
        %s184 = sand.u32 %s72, 1
        %s185 = scalar_lea.sflag [#allocation8], %s184
        %s186 = sand.u32 %s72, 1
        %s187 = smul.addr %s186, 8
        %s188 = scalar_lea.vmem [#allocation7], %s187
        // Predicated region
        $region33: #{tpu_custom_call.1} parent=27 // pred_check
          %p189 = pneg %p85
        $region34: #{tpu_custom_call.1} parent=27 // pred_check_branch
          %191 = sbr.rel (%p189) target = $region36
        $region35: #{tpu_custom_call.1} parent=27 // pred_region
          %192 = dma.done %s185, 128
        $region36: #{tpu_custom_call.1} parent=27 // pred_fallthru
          _
        %s193 = sand.u32 %s44, 1
        %s194 = scalar_lea.sflag [#allocation5], %s193
        %s195 = sand.u32 %s44, 1
        %s196 = smul.addr %s195, 8
        %s197 = scalar_lea.vmem [#allocation4], %s196
        %p198 = pneg %p57
        %p199 = pneg %p54
        %s200 = sand.u32 %s72, 1
        %s201 = scalar_lea.sflag [#allocation8], %s200
        %s202 = sand.u32 %s72, 1
        %s203 = smul.addr %s202, 8
        %s204 = scalar_lea.vmem [#allocation7], %s203
        %p205 = pneg %p85
        %p206 = pneg %p82
        %p207 = pneg %p111
        %p208 = pneg %p108
        %s209 = sand.u32 %s98, 1
        %s210 = scalar_lea.sflag [#allocation6], %s209
        %s211 = sand.u32 %s98, 1
        %s212 = scalar_lea.vmem [#allocation9], %s211
        %p213 = scmp.eq.s32.totalorder %s27, 0
        // Predicated region
        $region37: #{tpu_custom_call.1} parent=27 // pred_check
          %p214 = pneg %p213
        $region38: #{tpu_custom_call.1} parent=27 // pred_check_branch
          %216 = sbr.rel (%p214) target = $region40
        $region39: #{tpu_custom_call.1} parent=27 // pred_region
          %217 = vst [vmem:[#allocation2] sm:$0xff] 0.0
          %218 = vst [vmem:[#allocation3] sm:$0xff] 0.0
        $region40: #{tpu_custom_call.1} parent=27 // pred_fallthru
          _
        %v219 = vld [vmem:[%s179] sm:$0xff]
        %v220 = vld [vmem:[%s188] sm:$0xff]
        %v221 = vld [vmem:[#allocation2] sm:$0xff]
        %v222 = vmul.f32 %v220, %v219
        %v223 = vadd.f32 %v221, %v222
        %224 = vst [vmem:[#allocation2] sm:$0xff] %v223
        %v225 = vld [vmem:[#allocation3] sm:$0xff]
        %v226 = vadd.f32 %v219, %v220
        %v227 = vadd.f32 %v225, %v226
        %228 = vst [vmem:[#allocation3] sm:$0xff] %v227
        // Predicated region
        $region41: #{tpu_custom_call.1} parent=27 // pred_check
          %p229 = pneg %p213
        $region42: #{tpu_custom_call.1} parent=27 // pred_check_branch
          %231 = sbr.rel (%p229) target = $region44
        $region43: #{tpu_custom_call.1} parent=27 // pred_region
          %v232 = vld [vmem:[#allocation2] sm:$0xff]
          %233 = vadd.xlane.f32.xlu0 %v232
          %v234 = vpop.xlane.xlu0 %233
          %v235 = vrot.slane %v234, 4
          %v236 = vadd.f32 %v234, %v235
          %v237 = vrot.slane %v236, 2
          %v238 = vadd.f32 %v236, %v237
          %v239 = vrot.slane %v238, 1
          %v240 = vadd.f32 %v238, %v239
          %s241 = vtos %v240
          %v242 = vld [vmem:[#allocation3] sm:$0xff]
          %243 = vadd.xlane.f32.xlu0 %v242
          %v244 = vpop.xlane.xlu0 %243
          %v245 = vrot.slane %v244, 4
          %v246 = vadd.f32 %v244, %v245
          %v247 = vrot.slane %v246, 2
          %v248 = vadd.f32 %v246, %v247
          %v249 = vrot.slane %v248, 1
          %v250 = vadd.f32 %v248, %v249
          %s251 = vtos %v250
          %s252 = smul.f32 %s241, 2.0
          %s253 = sadd.f32 %s252, 1e-05
          %s254 = sadd.f32 %s251, 1e-05
          %v255 = vstv %s254
          %v256 = vrcp.pop %v255
          %s257 = vtos %v256
          %s258 = smul.f32 %s253, %s257
          %v259 = vstv %s258
          %260 = vst [vmem:[%s212] sm:$0x1] %v259
        $region44: #{tpu_custom_call.1} parent=27 // pred_fallthru
          _
        %s261 = sand.u32 %s98, 1
        %s262 = scalar_lea.sflag [#allocation6], %s261
        %s263 = sand.u32 %s98, 1
        %s264 = scalar_lea.vmem [#allocation9], %s263
        // Predicated region
        $region45: #{tpu_custom_call.1} parent=27 // pred_check
          %p265 = pneg %p108
        $region46: #{tpu_custom_call.1} parent=27 // pred_check_branch
          %267 = sbr.rel (%p265) target = $region48
        $region47: #{tpu_custom_call.1} parent=27 // pred_region
          %s269 = ssub.s32 16, 16
          %270 = vsyncadd %s262, %s269
          %s271 = smul.addr %s26, 16
          %s272 = scalar_lea.hbm %s2, %s271
          %s274 = sshll.u32 %s264, 4
          %s275 = int_to_ptr.vmem [resolvable:$true] %s274
          %277 = dma.vmem_to_hbm [thread:$0]  %s275, 16, %s272, %s262
        $region48: #{tpu_custom_call.1} parent=27 // pred_fallthru
          _
      $region28: #{tpu_custom_call.1} parent=5 // pred_fallthru
        _
      %p278 = scmp.le.s32.totalorder 2, %s17
      // Predicated region
      $region49: #{tpu_custom_call.1} parent=5 // pred_check
        %p279 = pneg %p278
      $region50: #{tpu_custom_call.1} parent=5 // pred_check_branch
        %281 = sbr.rel (%p279) target = $region52
      $region51: #{tpu_custom_call.1} parent=5 // pred_region
        %s282 = ssub.s32 %s17, 2
        // Predicated region
        $region53: #{tpu_custom_call.1} parent=51 // pred_check
          %p283 = pneg %p114
        $region54: #{tpu_custom_call.1} parent=51 // pred_check_branch
          %285 = sbr.rel (%p283) target = $region56
        $region55: #{tpu_custom_call.1} parent=51 // pred_region
          %s286 = sand.u32 %s99, 1
          %s287 = scalar_lea.sflag [#allocation6], %s286
          %s288 = sand.u32 %s99, 1
          %s289 = scalar_lea.vmem [#allocation9], %s288
          %290 = dma.done %s287, 16
        $region56: #{tpu_custom_call.1} parent=51 // pred_fallthru
          _
      $region52: #{tpu_custom_call.1} parent=5 // pred_fallthru
        _
    $region6: #{tpu_custom_call.1} parent=1 // loop_footer
      %s21 = sadd.s32 1, %s17
    $region7: #{tpu_custom_call.1} parent=1 // loop_footer_branch
      %16 = sbr.rel target = $region3
    $region8: #{tpu_custom_call.1} parent=1 // loop_exit
      _
    %291 = vsyncpa [#allocation5], 1
    %s292 = scalar_lea.sflag [#allocation5], 1
    %293 = vsyncpa %s292, 1
    %294 = vsyncpa [#allocation8], 1
    %s295 = scalar_lea.sflag [#allocation8], 1
    %296 = vsyncpa %s295, 1
    %297 = vsyncpa [#allocation6], 1
    %s298 = scalar_lea.sflag [#allocation6], 1
    %299 = vsyncpa %s298, 1

</llo_original>
